<compile_context>
chip_gen: v7x
topology: tpu7x:2x2x1
jax: 0.10.0
libtpu: 0.0.40
codegen_flags: <defaults>
</compile_context>

<pallas_src>
import jax
import jax.numpy as jnp
from jax.experimental import pallas as pl
from jax.experimental.pallas import tpu as pltpu


def _round_up(x, m):
    return ((x + m - 1) // m) * m


def _choose_tb(batch, cap=512):
    """Row tile: multiple of 8, minimal batch padding, >=2 grid steps when possible."""
    batch = max(int(batch), 1)
    if batch <= 8:
        return 8
    n_steps = max(2, -(-batch // cap))            # >=2 so both v7x TCs get work
    return min(cap, _round_up(-(-batch // n_steps), 8))


def _fused_embedding_kernel(gidx_ref, table_ref, out_ref):
    """gidx_ref : (TB, F)    int32 row-band-shifted indices (pipelined tiles).
       table_ref: (Vp, Dp)   f32 block-diagonal fused table (VMEM resident).
       out_ref  : (TB, Dtot) f32 concatenated embeddings (useful columns only)."""
    gidx = gidx_ref[...]                          # (TB, F) int32
    num_feat = gidx.shape[1]
    v_pad = table_ref.shape[0]
    d_tot = out_ref.shape[1]

    # Single hoisted (1, Vp) iota; accumulate the one-hot directly in table
    # dtype -- no int32 accumulator, no full-tile cast.
    iota = jax.lax.broadcasted_iota(jnp.int32, (1, v_pad), 1)
    onehot = (iota == gidx[:, 0:1]).astype(table_ref.dtype)
    for i in range(1, num_feat):
        onehot = onehot + (iota == gidx[:, i:i + 1]).astype(table_ref.dtype)

    # One MXU pass over the block-diagonal table; store only the d_tot useful
    # columns so padded columns never reach HBM.
    res = jnp.dot(onehot, table_ref[...], preferred_element_type=jnp.float32)
    out_ref[...] = res[:, :d_tot]


def build_fused_embedding(tables):
    """Module-init step: build the block-diagonal fused table ONCE (not per call)."""
    emb_szs = [t.shape for t in tables]
    v_tot = sum(v for v, _ in emb_szs)
    d_tot = sum(d for _, d in emb_szs)
    v_pad = _round_up(v_tot, 128)
    d_pad = _round_up(d_tot, 128)
    fused = jnp.zeros((v_pad, d_pad), jnp.float32)
    v_offsets = []
    vo = do = 0
    for (v, d), t in zip(emb_szs, tables):
        fused = fused.at[vo:vo + v, do:do + d].set(t.astype(jnp.float32))
        v_offsets.append(vo)
        vo += v
        do += d
    v_offsets = jnp.asarray(v_offsets, dtype=jnp.int32)
    vocab_sizes = jnp.asarray([v for v, _ in emb_szs], dtype=jnp.int32)
    return fused, v_offsets, vocab_sizes, d_tot


def embedding_layer_forward(x_idx, fused_table, v_offsets, vocab_sizes, d_tot, *, tb=None):
    """x_idx: int array [..., F]; fused_table/v_offsets/vocab_sizes from build_fused_embedding."""
    num_feat = int(v_offsets.shape[0])
    v_pad, d_pad = fused_table.shape
    assert x_idx.shape[-1] == num_feat
    lead_shape = x_idx.shape[:-1]
    batch = 1
    for s in lead_shape:
        batch *= s
    x_flat = x_idx.reshape(batch, num_feat).astype(jnp.int32)   # glue: flatten batch

    # Clamp per feature (guards OOB indices from leaking into another feature's
    # row band), then shift into this feature's row band of the fused table.
    x_flat = jnp.clip(x_flat, 0, vocab_sizes[None, :] - 1)
    gidx = x_flat + v_offsets[None, :]

    # Batch tiling: minimal padding, >=2 grid steps when possible, TB multiple of 8.
    if tb is None:
        tb = _choose_tb(batch)
    b_pad = _round_up(max(batch, 1), tb)
    if b_pad != batch:
        # Pad rows with index v_pad: matches no one-hot column -> all-zero rows,
        # and those rows are sliced off below anyway.
        gidx = jnp.pad(gidx, ((0, b_pad - batch), (0, 0)), constant_values=v_pad)

    # Explicit VMEM budget: single-buffered table + double-buffered idx/out tiles
    # (lane-padded to 128 in VMEM) + live one-hot / matmul intermediates.
    vmem_bytes = (v_pad * d_pad * 4          # resident table (1 buffer)
                  + 2 * tb * 128 * 4         # idx tiles (double-buffered)
                  + 2 * tb * 128 * 4         # out tiles (double-buffered)
                  + 4 * tb * v_pad * 4)      # one-hot + matmul intermediates
    vmem_limit = int(min(max(vmem_bytes + (4 << 20), 16 << 20), 64 << 20))

    grid = (b_pad // tb,)
    out = pl.pallas_call(
        _fused_embedding_kernel,
        out_shape=jax.ShapeDtypeStruct((b_pad, d_tot), jnp.float32),
        grid=grid,
        in_specs=[
            pl.BlockSpec((tb, num_feat), lambda b: (b, 0)),      # pipelined idx tiles
            pl.BlockSpec((v_pad, d_pad), lambda b: (0, 0),       # table resident in VMEM,
                         pipeline_mode=pl.Buffered(1)),          #   single-buffered
        ],
        out_specs=pl.BlockSpec((tb, d_tot), lambda b: (b, 0)),   # only useful columns hit HBM
        compiler_params=pltpu.CompilerParams(
            dimension_semantics=("parallel",),                   # shard batch across TCs (v7x)
            vmem_limit_bytes=vmem_limit),
    )(gidx, fused_table)

    if b_pad != batch:
        out = out[:batch]                                        # glue: drop padded rows (if any)
    return out.reshape(*lead_shape, d_tot)                       # glue: restore batch dims


if __name__ == "__main__":
    # Small shapes consistent with the module: 3 categorical features.
    emb_szs = [(10, 4), (7, 8), (5, 16)]    # (vocab, emb_dim) per feature
    B = 8                                   # batch
    F = len(emb_szs)

    key = jax.random.PRNGKey(0)
    k_idx, *k_tabs = jax.random.split(key, 1 + F)

    # Deterministic parameter init (PyTorch nn.Embedding default: N(0, 1)).
    tables = [
        jax.random.normal(k, (v, d), dtype=jnp.float32)
        for k, (v, d) in zip(k_tabs, emb_szs)
    ]

    # Integer categorical inputs, shape [B, F].
    maxv = jnp.array([v for (v, _) in emb_szs], dtype=jnp.int32)
    x_idx = jax.random.randint(k_idx, (B, F), 0, 1_000_000, dtype=jnp.int32) % maxv

    # "Module init": build the fused block-diagonal table once, reuse every call.
    fused_table, v_offsets, vocab_sizes, d_tot = build_fused_embedding(tables)

    out = embedding_layer_forward(x_idx, fused_table, v_offsets, vocab_sizes, d_tot)
    out = jax.block_until_ready(out)

    # Reference check (plain JAX gather + concat).
    ref = jnp.concatenate([tables[i][x_idx[:, i]] for i in range(F)], axis=-1)
    assert out.shape == (B, d_tot)
    assert jnp.allclose(out, ref, atol=1e-5), "mismatch vs reference"

    print("KERNEL_OK")
</pallas_src>

<mosaic_0001>
module attributes {stable_mosaic.version = 11 : i64} {
  func.func @_fused_embedding_kernel(%arg0: i32, %arg1: memref<8x3xi32, #tpu.memory_space<vmem>>, %arg2: memref<128x128xf32, #tpu.memory_space<vmem>>, %arg3: memref<8x28xf32, #tpu.memory_space<vmem>>) attributes {dimension_semantics = [#tpu.dimension_semantics<parallel>], iteration_bounds = array<i64: 1>, scalar_prefetch = 0 : i64, scratch_operands = 0 : i64, tpu.core_type = #tpu.core_type<tc>, window_params = [{transform_indices = @transform_0, window_bounds = array<i64: 8, 3>}, {pipeline_mode = #tpu.pipeline_mode<synchronous>, transform_indices = @transform_1, window_bounds = array<i64: 128, 128>}, {transform_indices = @transform_2, window_bounds = array<i64: 8, 28>}]} {
    %c0 = arith.constant 0 : index
    %c0_0 = arith.constant 0 : index
    %0 = vector.load %arg1[%c0, %c0_0] : memref<8x3xi32, #tpu.memory_space<vmem>>, vector<8x3xi32>
    %1 = tpu.iota {dimensions = array<i32: 1>} : vector<1x128xi32>
    %2 = vector.extract_strided_slice %0 {offsets = [0, 0], sizes = [8, 1], strides = [1, 1]} : vector<8x3xi32> to vector<8x1xi32>
    %3 = vector.broadcast %1 : vector<1x128xi32> to vector<8x128xi32>
    %4 = vector.broadcast %2 : vector<8x1xi32> to vector<8x128xi32>
    %5 = arith.cmpi eq, %3, %4 : vector<8x128xi32>
    %6 = arith.extui %5 : vector<8x128xi1> to vector<8x128xi32>
    %7 = arith.sitofp %6 : vector<8x128xi32> to vector<8x128xf32>
    %8 = vector.extract_strided_slice %0 {offsets = [0, 1], sizes = [8, 1], strides = [1, 1]} : vector<8x3xi32> to vector<8x1xi32>
    %9 = vector.broadcast %1 : vector<1x128xi32> to vector<8x128xi32>
    %10 = vector.broadcast %8 : vector<8x1xi32> to vector<8x128xi32>
    %11 = arith.cmpi eq, %9, %10 : vector<8x128xi32>
    %12 = arith.extui %11 : vector<8x128xi1> to vector<8x128xi32>
    %13 = arith.sitofp %12 : vector<8x128xi32> to vector<8x128xf32>
    %14 = arith.addf %7, %13 : vector<8x128xf32>
    %15 = vector.extract_strided_slice %0 {offsets = [0, 2], sizes = [8, 1], strides = [1, 1]} : vector<8x3xi32> to vector<8x1xi32>
    %16 = vector.broadcast %1 : vector<1x128xi32> to vector<8x128xi32>
    %17 = vector.broadcast %15 : vector<8x1xi32> to vector<8x128xi32>
    %18 = arith.cmpi eq, %16, %17 : vector<8x128xi32>
    %19 = arith.extui %18 : vector<8x128xi1> to vector<8x128xi32>
    %20 = arith.sitofp %19 : vector<8x128xi32> to vector<8x128xf32>
    %21 = arith.addf %14, %20 : vector<8x128xf32>
    %c0_1 = arith.constant 0 : index
    %c0_2 = arith.constant 0 : index
    %22 = vector.load %arg2[%c0_1, %c0_2] : memref<128x128xf32, #tpu.memory_space<vmem>>, vector<128x128xf32>
    %cst = arith.constant dense<0.000000e+00> : vector<8x128xf32>
    %23 = tpu.matmul %21, %22, %cst {dimension_numbers = #tpu.dot_dimension_numbers<[1], [0], [0], [1], [0, 0, 1, 1], [], []>} : vector<8x128xf32>, vector<128x128xf32>, vector<8x128xf32> -> vector<8x128xf32>
    %24 = vector.extract_strided_slice %23 {offsets = [0, 0], sizes = [8, 28], strides = [1, 1]} : vector<8x128xf32> to vector<8x28xf32>
    %c0_3 = arith.constant 0 : index
    %c0_4 = arith.constant 0 : index
    %25 = vector.load %arg3[%c0_3, %c0_4] : memref<8x28xf32, #tpu.memory_space<vmem>>, vector<8x28xf32>
    tpu.vector_store %arg3[%c0_3, %c0_4], %24 {strides = array<i32>} : memref<8x28xf32, #tpu.memory_space<vmem>>, vector<8x28xf32>,
    return
  }
  func.func @transform_0(%arg0: i32) -> (i32, i32) {
    %c0_i32 = arith.constant 0 : i32
    %c0_i32_0 = arith.constant 0 : i32
    return %arg0, %c0_i32 : i32, i32
  }
  func.func @transform_1(%arg0: i32) -> (i32, i32) {
    %c0_i32 = arith.constant 0 : i32
    %c0_i32_0 = arith.constant 0 : i32
    %c0_i32_1 = arith.constant 0 : i32
    return %c0_i32, %c0_i32_0 : i32, i32
  }
  func.func @transform_2(%arg0: i32) -> (i32, i32) {
    %c0_i32 = arith.constant 0 : i32
    %c0_i32_0 = arith.constant 0 : i32
    return %arg0, %c0_i32 : i32, i32
  }
}

</mosaic_0001>

<llo_original>
// kernel: tpu_custom_call.1
$region0: #{tpu_custom_call.1}
  #allocation0 [shape = 'u32[]', space=smem, size = 0x4, offset = 0x4, fixed_abs, tag = 'smem constant byte address 0x4 - core index']
  #allocation1 [shape = 'u32[144,128]{1,0:T(1,128)}', space=vmem, size = 0x12000, scoped, tag = 'internal scratch']
  %s0 = inlined_call_operand.vmem [shape: s32[8,3], index: 0, kind: input, shape index: {}]
  %s1 = inlined_call_operand.hbm [shape: f32[128,128], index: 1, kind: input, shape index: {}]
  %s2 = inlined_call_operand.hbm [shape: f32[8,28], index: 2, kind: output, shape index: {}]
  %s3 = sld [smem:[#allocation0]]
  $region22: #{tpu_custom_call.1} parent=0
    _
  %s5 = ssub.s32 1, %s3
  %s6 = scalar_select 0, %s5, %s3
  $region1: #{tpu_custom_call.1} parent=0
    #allocation2 [shape = 'u8[65536]{0}', space=vmem, size = 0x10000, scoped, tag = 'input window, operand 1, single buffered']
    #allocation3 [shape = 's32[1]{0}', space=sflag, size = 0x4, scoped, tag = 'scoped memory for tpu_custom_call.1']
    #allocation4 [shape = 's32[1]{0}', space=sflag, size = 0x4, scoped, tag = 'scoped memory for tpu_custom_call.1']
    #allocation5 [shape = 'u8[4096]{0}', space=vmem, size = 0x1000, scoped, tag = 'output window, operand 0, single buffered']
    %7 = vsyncpa [#allocation3], 0
    %8 = vsyncpa [#allocation4], 0
    // Predicated region
    $region2: #{tpu_custom_call.1} parent=1 // pred_check
      _
    $region3: #{tpu_custom_call.1} parent=1 // pred_check_branch
      %10 = sbr.rel (0) target = $region5
    $region4: #{tpu_custom_call.1} parent=1 // pred_region
      _
    $region5: #{tpu_custom_call.1} parent=1 // pred_fallthru
      _
    // Predicated region
    $region6: #{tpu_custom_call.1} parent=1 // pred_check
      _
    $region7: #{tpu_custom_call.1} parent=1 // pred_check_branch
      %12 = sbr.rel (0) target = $region9
    $region8: #{tpu_custom_call.1} parent=1 // pred_region
      %s14 = ssub.s32 2048, 2048
      %15 = vsyncadd [#allocation3], %s14
      %s16 = sshll.u32 [#allocation2], 4
      %s17 = int_to_ptr.vmem [resolvable:$true] %s16
      %22 = dma.hbm_to_vmem [thread:$0]  %s1, 2048, %s17, [#allocation3], 128, 128, 8
    $region9: #{tpu_custom_call.1} parent=1 // pred_fallthru
      _
    // Predicated region
    $region10: #{tpu_custom_call.1} parent=1 // pred_check
      _
    $region11: #{tpu_custom_call.1} parent=1 // pred_check_branch
      %24 = sbr.rel (0) target = $region13
    $region12: #{tpu_custom_call.1} parent=1 // pred_region
      %25 = dma.done [#allocation3], 2048
    $region13: #{tpu_custom_call.1} parent=1 // pred_fallthru
      _
    %v26 = vld [vmem:[%s0] sm:$0xff]
    %v27 = vlaneseq
    %v28 = vand.u32 %v27, 127
    %29 = vset.pattern.permute.xlu0 0
    %30 = vperm.xlu0 %29, %v26
    %v31 = vpop.permute.xlu0 %30
    %vm32 = vcmp.eq.s32.totalorder %v28, %v31
    %v33 = vsel %vm32, 1, 0
    %v34 = vcvt.s32.f32 %v33
    %35 = vset.pattern.permute.xlu0 1
    %36 = vperm.xlu0 %35, %v26
    %v37 = vpop.permute.xlu0 %36
    %vm38 = vcmp.eq.s32.totalorder %v28, %v37
    %v39 = vsel %vm38, 1, 0
    %v40 = vcvt.s32.f32 %v39
    %v41 = vadd.f32 %v34, %v40
    %42 = vset.pattern.permute.xlu0 2
    %43 = vperm.xlu0 %42, %v26
    %v44 = vpop.permute.xlu0 %43
    %vm45 = vcmp.eq.s32.totalorder %v28, %v44
    %v46 = vsel %vm45, 1, 0
    %v47 = vcvt.s32.f32 %v46
    %v48 = vadd.f32 %v41, %v47
    %v49 = vld [vmem:[#allocation2] sm:$0xff]
    %v50 = vld [vmem:[#allocation2 + $0x8] sm:$0xff]
    %v51 = vld [vmem:[#allocation2 + $0x10] sm:$0xff]
    %v52 = vld [vmem:[#allocation2 + $0x18] sm:$0xff]
    %v53 = vld [vmem:[#allocation2 + $0x20] sm:$0xff]
    %v54 = vld [vmem:[#allocation2 + $0x28] sm:$0xff]
    %v55 = vld [vmem:[#allocation2 + $0x30] sm:$0xff]
    %v56 = vld [vmem:[#allocation2 + $0x38] sm:$0xff]
    %v57 = vld [vmem:[#allocation2 + $0x40] sm:$0xff]
    %v58 = vld [vmem:[#allocation2 + $0x48] sm:$0xff]
    %v59 = vld [vmem:[#allocation2 + $0x50] sm:$0xff]
    %v60 = vld [vmem:[#allocation2 + $0x58] sm:$0xff]
    %v61 = vld [vmem:[#allocation2 + $0x60] sm:$0xff]
    %v62 = vld [vmem:[#allocation2 + $0x68] sm:$0xff]
    %v63 = vld [vmem:[#allocation2 + $0x70] sm:$0xff]
    %v64 = vld [vmem:[#allocation2 + $0x78] sm:$0xff]
    %65 = vmatprep.subr.mxu0 0.0
    %66 = vmatpush1.msra.mxu0 %v49
    %67 = vmatprep.subr.mxu0 0.0
    %68 = vmatpush1.msra.mxu0 %v50
    %69 = vmatprep.subr.mxu0 0.0
    %70 = vmatpush1.msra.mxu0 %v51
    %71 = vmatprep.subr.mxu0 0.0
    %72 = vmatpush1.msra.mxu0 %v52
    %73 = vmatprep.subr.mxu0 0.0
    %74 = vmatpush1.msra.mxu0 %v53
    %75 = vmatprep.subr.mxu0 0.0
    %76 = vmatpush1.msra.mxu0 %v54
    %77 = vmatprep.subr.mxu0 0.0
    %78 = vmatpush1.msra.mxu0 %v55
    %79 = vmatprep.subr.mxu0 0.0
    %80 = vmatpush1.msra.mxu0 %v56
    %81 = vmatprep.subr.mxu0 0.0
    %82 = vmatpush1.msra.mxu0 %v57
    %83 = vmatprep.subr.mxu0 0.0
    %84 = vmatpush1.msra.mxu0 %v58
    %85 = vmatprep.subr.mxu0 0.0
    %86 = vmatpush1.msra.mxu0 %v59
    %87 = vmatprep.subr.mxu0 0.0
    %88 = vmatpush1.msra.mxu0 %v60
    %89 = vmatprep.subr.mxu0 0.0
    %90 = vmatpush1.msra.mxu0 %v61
    %91 = vmatprep.subr.mxu0 0.0
    %92 = vmatpush1.msra.mxu0 %v62
    %93 = vmatprep.subr.mxu0 0.0
    %94 = vmatpush1.msra.mxu0 %v63
    %95 = vmatprep.subr.mxu0 0.0
    %96 = vmatpush1.msra.mxu0 %v64
    %97 = vmatprep.subr.mxu0 0.0
    %98 = vmatpush1.msra.mxu0 0.0
    %99 = vmatprep.subr.mxu0 0.0
    %100 = vmatpush1.msra.mxu0 0.0
    %101 = vmatprep.subr.mxu0 0.0
    %102 = vmatpush1.msra.mxu0 0.0
    %103 = vmatprep.subr.mxu0 0.0
    %104 = vmatpush1.msra.mxu0 0.0
    %105 = vmatprep.subr.mxu0 0.0
    %106 = vmatpush1.msra.mxu0 0.0
    %107 = vmatprep.subr.mxu0 0.0
    %108 = vmatpush1.msra.mxu0 0.0
    %109 = vmatprep.subr.mxu0 0.0
    %110 = vmatpush1.msra.mxu0 0.0
    %111 = vmatprep.subr.mxu0 0.0
    %112 = vmatpush1.msra.mxu0 0.0
    %113 = vmatprep.subr.mxu0 0.0
    %114 = vmatpush1.msra.mxu0 0.0
    %115 = vmatprep.subr.mxu0 0.0
    %116 = vmatpush1.msra.mxu0 0.0
    %117 = vmatprep.subr.mxu0 0.0
    %118 = vmatpush1.msra.mxu0 0.0
    %119 = vmatprep.subr.mxu0 0.0
    %120 = vmatpush1.msra.mxu0 0.0
    %121 = vmatprep.subr.mxu0 0.0
    %122 = vmatpush1.msra.mxu0 0.0
    %123 = vmatprep.subr.mxu0 0.0
    %124 = vmatpush1.msra.mxu0 0.0
    %125 = vmatprep.subr.mxu0 0.0
    %126 = vmatpush1.msra.mxu0 0.0
    %127 = vmatprep.subr.mxu0 0.0
    %128 = vmatpush1.msra.mxu0 0.0
    %129 = vmatprep.mubr.f32.mxu0 0.0
    %130 = vmatmul.mubr.f32.gmra.mrb[0].mxu0 %v48
    %v131 = vpop.f32.mrb[0].mxu0
    %v132 = vadd.f32 0.0, %v131
    %v133 = vpop.f32.mrb[0].mxu0
    %134 = vdwg.mxu0
    %vm135 = vcmask 228352
    %136 = vst.msk [vmem:[#allocation5] sm:$0xff] %vm135, %v132
    // Predicated region
    $region14: #{tpu_custom_call.1} parent=1 // pred_check
      _
    $region15: #{tpu_custom_call.1} parent=1 // pred_check_branch
      %138 = sbr.rel (0) target = $region17
    $region16: #{tpu_custom_call.1} parent=1 // pred_region
      %s140 = ssub.s32 128, 128
      %141 = vsyncadd [#allocation4], %s140
      %s143 = sshll.u32 [#allocation5], 4
      %s144 = int_to_ptr.vmem [resolvable:$true] %s143
      %146 = dma.vmem_to_hbm [thread:$0]  %s144, 128, %s2, [#allocation4]
    $region17: #{tpu_custom_call.1} parent=1 // pred_fallthru
      _
    // Predicated region
    $region18: #{tpu_custom_call.1} parent=1 // pred_check
      _
    $region19: #{tpu_custom_call.1} parent=1 // pred_check_branch
      %148 = sbr.rel (0) target = $region21
    $region20: #{tpu_custom_call.1} parent=1 // pred_region
      %149 = dma.done [#allocation4], 128
    $region21: #{tpu_custom_call.1} parent=1 // pred_fallthru
      _
    %150 = vsyncpa [#allocation3], 1
    %151 = vsyncpa [#allocation4], 1

</llo_original>
